<compile_context>
chip_gen: v5e
topology: v5e:2x2
jax: 0.10.0
libtpu: 0.0.40
codegen_flags: <defaults>
</compile_context>

<pallas_src>
import functools

import numpy as np
import jax
import jax.numpy as jnp
from jax import lax
from jax.experimental import pallas as pl
from jax.experimental.pallas import tpu as pltpu

_EPS = 1e-5


def _bn_scale_shift(gamma, beta, mean, var, eps=_EPS):
    scale = gamma / jnp.sqrt(var + eps)
    shift = beta - mean * scale
    return scale.astype(jnp.float32), shift.astype(jnp.float32)


# ---------------------------------------------------------------------------
# Kernel 1: base_link  out = relu(x @ W + b)   (Dropout(0.5) = identity, eval)
# Tiled over the output-feature axis (lane-dense output, [N, f_out]).
# ---------------------------------------------------------------------------
def _matmul_bias_relu_kernel(x_ref, w_ref, b_ref, o_ref):
    acc = jnp.dot(x_ref[...], w_ref[...], preferred_element_type=jnp.float32)
    o_ref[...] = jnp.maximum(acc + b_ref[...], 0.0).astype(o_ref.dtype)


def matmul_bias_relu(x, w, b, tn=512):
    M, K = x.shape
    K2, Nc = w.shape
    assert K == K2
    tn = min(tn, Nc)
    if Nc % tn != 0:
        tn = Nc
    b2 = jnp.reshape(b, (1, Nc)).astype(jnp.float32)
    # TODO(synk): add K-dim tiling + f32 accumulator scratch if f_in grows
    # beyond what fits VMEM (not needed at these sizes).
    return pl.pallas_call(
        _matmul_bias_relu_kernel,
        out_shape=jax.ShapeDtypeStruct((M, Nc), jnp.float32),
        grid=(Nc // tn,),
        in_specs=[
            pl.BlockSpec((M, K), lambda j: (0, 0)),
            pl.BlockSpec((K, tn), lambda j: (0, j)),
            pl.BlockSpec((1, tn), lambda j: (0, j)),
        ],
        out_specs=pl.BlockSpec((M, tn), lambda j: (0, j)),
        compiler_params=pltpu.CompilerParams(
            dimension_semantics=("parallel",)),
    )(x.astype(jnp.float32), w.astype(jnp.float32), b2)


# ---------------------------------------------------------------------------
# Kernel 2: fully fused Dimension_UpsampleCutBlock (all samples, one step).
#   x_ref    : [Cin,  M]          input, channels-on-sublane, M = N*H*W lanes
#   w1_ref   : [Cmid, Cin]        1x1-conv weight^T with BN2d scale folded in
#   b1_ref   : [Cmid, 1]          BN2d shift
#   mask_ref : [9,    M]          per-tap spatial-boundary validity masks
#   w3_ref   : [3*Cmid, 9*Cmid]   3 depth-variant conv weights (BN3d scale in)
#   b3_ref   : [3*Cmid, 1]        BN3d shift (tiled x3)
#   o_ref    : [3*Cmid, M]        3 depth-variant output slices
#   t_ref    : [9*Cmid, M]        VMEM scratch: im2col buffer
# ---------------------------------------------------------------------------
def _linker_block_kernel(width, x_ref, w1_ref, b1_ref, mask_ref, w3_ref,
                         b3_ref, o_ref, t_ref):
    M = x_ref.shape[1]
    Cmid = w1_ref.shape[0]

    # 1x1 Conv2d + BN2d(eval) + ReLU  (scale pre-folded into w1)
    y = jnp.maximum(
        jnp.dot(w1_ref[...], x_ref[...], preferred_element_type=jnp.float32)
        + b1_ref[...], 0.0)                                   # [Cmid, M]

    # im2col: 9 spatial taps via lane rolls + boundary masks.
    mask = mask_ref[...]
    for kh in range(3):
        for kw in range(3):
            t = kh * 3 + kw
            off = (kh - 1) * width + (kw - 1)                 # static
            if off == 0:
                shifted = y
            else:
                shifted = pltpu.roll(y, shift=(-off) % M, axis=1)
                shifted = shifted * mask[t:t + 1, :]
            t_ref[t * Cmid:(t + 1) * Cmid, :] = shifted

    # One K = 9*Cmid contraction producing all 3 depth variants at once,
    # then BN3d shift + ReLU and a lane-dense store.
    out = jnp.dot(w3_ref[...], t_ref[...],
                  preferred_element_type=jnp.float32) + b3_ref[...]
    o_ref[...] = jnp.maximum(out, 0.0).astype(o_ref.dtype)


def _tap_masks(N, H, W):
    """[9, N*H*W] float32 validity masks for the 3x3 spatial taps."""
    hh = np.arange(H)[:, None]
    ww = np.arange(W)[None, :]
    rows = []
    for kh in range(3):
        for kw in range(3):
            dh, dw = kh - 1, kw - 1
            m = ((hh + dh >= 0) & (hh + dh < H) &
                 (ww + dw >= 0) & (ww + dw < W)).astype(np.float32)
            rows.append(np.tile(m.reshape(-1), N))
    return np.stack(rows, axis=0)


def dimension_upsample_cut_block(x_nchw, p):
    """torch Dimension_UpsampleCutBlock.forward: [N,C,H,W] -> [N,C',H,H,W]."""
    N, Cin, H, W = x_nchw.shape
    Cmid = p["w1"].shape[1]
    D = H
    assert D >= 2  # TODO(synk): D == 1 would need a kd=1-only weight variant.
    M = N * H * W

    s2, b2 = _bn_scale_shift(p["bn2d_gamma"], p["bn2d_beta"],
                             p["bn2d_mean"], p["bn2d_var"])
    s3, b3 = _bn_scale_shift(p["bn3d_gamma"], p["bn3d_beta"],
                             p["bn3d_mean"], p["bn3d_var"])

    # Fold BN2d scale into the 1x1 conv weights; transpose to [Cmid, Cin].
    w1_eff = (jnp.transpose(p["w1"]) * s2[:, None]).astype(jnp.float32)
    b1c = b2.reshape(Cmid, 1)

    # Depth-variant 3x3x3 weights: input is depth-replicated, so only the sum
    # over the valid kd taps matters.  variant 0: d=0 (kd in {1,2}),
    # variant 1: interior (all kd), variant 2: d=D-1 (kd in {0,1}).
    w3 = p["w3"].astype(jnp.float32)                 # [kd, kh, kw, cin, cout]
    variants = (w3[1] + w3[2], w3[0] + w3[1] + w3[2], w3[0] + w3[1])

    def to_mat(vw):   # [kh,kw,cin,cout] -> [cout, (kh*3+kw)*Cmid + cin]
        return jnp.transpose(vw, (3, 0, 1, 2)).reshape(Cmid, 9 * Cmid) * s3[:, None]

    w3_all = jnp.concatenate([to_mat(v) for v in variants], axis=0)  # [3*Cmid, 9*Cmid]
    b3_all = jnp.tile(b3.reshape(Cmid, 1), (3, 1))                   # [3*Cmid, 1]

    # Channels-on-sublane, (n, h, w) flattened on lanes.
    x_cm = jnp.transpose(x_nchw, (1, 0, 2, 3)).reshape(Cin, M).astype(jnp.float32)
    masks = jnp.asarray(_tap_masks(N, H, W))

    out_flat = pl.pallas_call(
        functools.partial(_linker_block_kernel, W),
        out_shape=jax.ShapeDtypeStruct((3 * Cmid, M), jnp.float32),
        grid=(1,),
        in_specs=[
            pl.BlockSpec((Cin, M), lambda i: (0, 0)),
            pl.BlockSpec((Cmid, Cin), lambda i: (0, 0)),
            pl.BlockSpec((Cmid, 1), lambda i: (0, 0)),
            pl.BlockSpec((9, M), lambda i: (0, 0)),
            pl.BlockSpec((3 * Cmid, 9 * Cmid), lambda i: (0, 0)),
            pl.BlockSpec((3 * Cmid, 1), lambda i: (0, 0)),
        ],
        out_specs=pl.BlockSpec((3 * Cmid, M), lambda i: (0, 0)),
        scratch_shapes=[pltpu.VMEM((9 * Cmid, M), jnp.float32)],
    )(x_cm, w1_eff, b1c, masks, w3_all, b3_all)

    # Expand the 3 unique slices to D depth positions (cheap XLA gather),
    # then back to PyTorch NCDHW layout.
    out5 = out_flat.reshape(3, Cmid, N, H, W)
    vidx = np.ones((D,), np.int32)
    vidx[0] = 0
    vidx[-1] = 2
    full = jnp.take(out5, jnp.asarray(vidx), axis=0)    # [D, Cmid, N, H, W]
    return jnp.transpose(full, (2, 1, 0, 3, 4))         # [N, Cmid, D, H, W]


# ---------------------------------------------------------------------------
# Module forward
# ---------------------------------------------------------------------------
def unet_linker_forward(params, encoder_features, final_vector):
    feature_linkers = [dimension_upsample_cut_block(feat, p)
                       for p, feat in zip(params["linkers"], encoder_features)]
    N = final_vector.shape[0]
    flat = final_vector.reshape(N, -1)
    # TODO(synk): nn.Dropout(0.5) is identity here (eval-mode); training-mode
    # stochastic dropout / BatchNorm batch statistics are not modeled.
    x = matmul_bias_relu(flat, params["base_w"], params["base_b"])
    return x, feature_linkers


# ---------------------------------------------------------------------------
# Deterministic parameter construction + pure-JAX reference for validation
# ---------------------------------------------------------------------------
def make_params(key, encoder_channel_list, decoder_channel_list, decoder_begin_size):
    keys = jax.random.split(key, 64)
    it = iter(keys)

    def nxt():
        return next(it)

    linkers = []
    for enc_c, dec_c in zip(encoder_channel_list[:-1], decoder_channel_list):
        linkers.append(dict(
            w1=0.2 * jax.random.normal(nxt(), (enc_c, dec_c), jnp.float32),
            bn2d_gamma=1.0 + 0.1 * jax.random.normal(nxt(), (dec_c,), jnp.float32),
            bn2d_beta=0.1 * jax.random.normal(nxt(), (dec_c,), jnp.float32),
            bn2d_mean=0.05 * jax.random.normal(nxt(), (dec_c,), jnp.float32),
            bn2d_var=jax.random.uniform(nxt(), (dec_c,), jnp.float32, 0.5, 1.5),
            w3=0.1 * jax.random.normal(nxt(), (3, 3, 3, dec_c, dec_c), jnp.float32),
            bn3d_gamma=1.0 + 0.1 * jax.random.normal(nxt(), (dec_c,), jnp.float32),
            bn3d_beta=0.1 * jax.random.normal(nxt(), (dec_c,), jnp.float32),
            bn3d_mean=0.05 * jax.random.normal(nxt(), (dec_c,), jnp.float32),
            bn3d_var=jax.random.uniform(nxt(), (dec_c,), jnp.float32, 0.5, 1.5),
        ))
    f_in = encoder_channel_list[-1]
    f_out = decoder_begin_size ** 3 * decoder_channel_list[-1]
    base_w = 0.2 * jax.random.normal(nxt(), (f_in, f_out), jnp.float32)
    base_b = 0.1 * jax.random.normal(nxt(), (f_out,), jnp.float32)
    return dict(linkers=linkers, base_w=base_w, base_b=base_b)


def _ref_block(x_nchw, p):
    s2, b2 = _bn_scale_shift(p["bn2d_gamma"], p["bn2d_beta"],
                             p["bn2d_mean"], p["bn2d_var"])
    s3, b3 = _bn_scale_shift(p["bn3d_gamma"], p["bn3d_beta"],
                             p["bn3d_mean"], p["bn3d_var"])
    y = jnp.einsum("nchw,cd->ndhw", x_nchw, p["w1"])
    y = jnp.maximum(y * s2[None, :, None, None] + b2[None, :, None, None], 0.0)
    N, C, H, W = y.shape
    xe = jnp.broadcast_to(y[:, :, None, :, :], (N, C, H, H, W))
    w3 = jnp.transpose(p["w3"], (4, 3, 0, 1, 2))  # -> OIDHW
    out = lax.conv_general_dilated(xe, w3, (1, 1, 1), "SAME",
                                   dimension_numbers=("NCDHW", "OIDHW", "NCDHW"))
    out = out * s3[None, :, None, None, None] + b3[None, :, None, None, None]
    return jnp.maximum(out, 0.0)


if __name__ == "__main__":
    key = jax.random.PRNGKey(0)
    k_param, k_f0, k_f1, k_v = jax.random.split(key, 4)

    encoder_channel_list = [4, 8, 16]
    decoder_channel_list = [8, 16]
    decoder_begin_size = 2
    N = 2

    params = make_params(k_param, encoder_channel_list, decoder_channel_list,
                         decoder_begin_size)

    encoder_features = [
        jax.random.normal(k_f0, (N, 4, 16, 16), jnp.float32),
        jax.random.normal(k_f1, (N, 8, 8, 8), jnp.float32),
    ]
    final_vector = jax.random.normal(k_v, (N, encoder_channel_list[-1]), jnp.float32)

    x, feats = unet_linker_forward(params, encoder_features, final_vector)
    x = jax.block_until_ready(x)
    feats = [jax.block_until_ready(f) for f in feats]

    # validate against a plain-JAX reference
    x_ref = jnp.maximum(final_vector.reshape(N, -1) @ params["base_w"]
                        + params["base_b"], 0.0)
    np.testing.assert_allclose(np.asarray(x), np.asarray(x_ref),
                               rtol=1e-4, atol=1e-4)
    for f, feat, p in zip(feats, encoder_features, params["linkers"]):
        ref = _ref_block(feat, p)
        assert f.shape == ref.shape, (f.shape, ref.shape)
        np.testing.assert_allclose(np.asarray(f), np.asarray(ref),
                                   rtol=1e-3, atol=1e-3)

    print("KERNEL_OK")
</pallas_src>

<mosaic_0001>
module attributes {stable_mosaic.version = 11 : i64} {
  func.func @_linker_block_kernel(%arg0: i32, %arg1: memref<4x512xf32, #tpu.memory_space<vmem>>, %arg2: memref<8x4xf32, #tpu.memory_space<vmem>>, %arg3: memref<8x1xf32, #tpu.memory_space<vmem>>, %arg4: memref<9x512xf32, #tpu.memory_space<vmem>>, %arg5: memref<24x72xf32, #tpu.memory_space<vmem>>, %arg6: memref<24x1xf32, #tpu.memory_space<vmem>>, %arg7: memref<24x512xf32, #tpu.memory_space<vmem>>, %arg8: memref<72x512xf32, #tpu.memory_space<vmem>>) attributes {dimension_semantics = [#tpu.dimension_semantics<arbitrary>], iteration_bounds = array<i64: 1>, scalar_prefetch = 0 : i64, scratch_operands = 1 : i64, tpu.core_type = #tpu.core_type<tc>, window_params = [{pipeline_mode = #tpu.pipeline_mode<synchronous>, transform_indices = @transform_0, window_bounds = array<i64: 4, 512>}, {pipeline_mode = #tpu.pipeline_mode<synchronous>, transform_indices = @transform_1, window_bounds = array<i64: 8, 4>}, {pipeline_mode = #tpu.pipeline_mode<synchronous>, transform_indices = @transform_2, window_bounds = array<i64: 8, 1>}, {pipeline_mode = #tpu.pipeline_mode<synchronous>, transform_indices = @transform_3, window_bounds = array<i64: 9, 512>}, {pipeline_mode = #tpu.pipeline_mode<synchronous>, transform_indices = @transform_4, window_bounds = array<i64: 24, 72>}, {pipeline_mode = #tpu.pipeline_mode<synchronous>, transform_indices = @transform_5, window_bounds = array<i64: 24, 1>}, {pipeline_mode = #tpu.pipeline_mode<synchronous>, transform_indices = @transform_6, window_bounds = array<i64: 24, 512>}]} {
    %c0 = arith.constant 0 : index
    %c0_0 = arith.constant 0 : index
    %0 = vector.load %arg2[%c0, %c0_0] : memref<8x4xf32, #tpu.memory_space<vmem>>, vector<8x4xf32>
    %c0_1 = arith.constant 0 : index
    %c0_2 = arith.constant 0 : index
    %1 = vector.load %arg1[%c0_1, %c0_2] : memref<4x512xf32, #tpu.memory_space<vmem>>, vector<4x512xf32>
    %cst = arith.constant dense<0.000000e+00> : vector<8x512xf32>
    %2 = tpu.matmul %0, %1, %cst {dimension_numbers = #tpu.dot_dimension_numbers<[1], [0], [0], [1], [0, 0, 1, 1], [], []>} : vector<8x4xf32>, vector<4x512xf32>, vector<8x512xf32> -> vector<8x512xf32>
    %c0_3 = arith.constant 0 : index
    %c0_4 = arith.constant 0 : index
    %3 = vector.load %arg3[%c0_3, %c0_4] : memref<8x1xf32, #tpu.memory_space<vmem>>, vector<8x1xf32>
    %4 = vector.broadcast %3 : vector<8x1xf32> to vector<8x512xf32>
    %5 = arith.addf %2, %4 : vector<8x512xf32>
    %cst_5 = arith.constant 0.000000e+00 : f32
    %6 = vector.broadcast %cst_5 : f32 to vector<8x512xf32>
    %7 = arith.maximumf %5, %6 : vector<8x512xf32>
    %c0_6 = arith.constant 0 : index
    %c0_7 = arith.constant 0 : index
    %8 = vector.load %arg4[%c0_6, %c0_7] : memref<9x512xf32, #tpu.memory_space<vmem>>, vector<9x512xf32>
    %c17_i32 = arith.constant 17 : i32
    %9 = tpu.dynamic_rotate %7 by %c17_i32 dim 1 : vector<8x512xf32>, i32 -> vector<8x512xf32>
    %10 = vector.extract_strided_slice %8 {offsets = [0, 0], sizes = [1, 512], strides = [1, 1]} : vector<9x512xf32> to vector<1x512xf32>
    %11 = vector.broadcast %10 : vector<1x512xf32> to vector<8x512xf32>
    %12 = arith.mulf %9, %11 : vector<8x512xf32>
    %c0_8 = arith.constant 0 : index
    %c0_9 = arith.constant 0 : index
    %13 = vector.load %arg8[%c0_8, %c0_9] : memref<72x512xf32, #tpu.memory_space<vmem>>, vector<8x512xf32>
    tpu.vector_store %arg8[%c0_8, %c0_9], %12 {strides = array<i32>} : memref<72x512xf32, #tpu.memory_space<vmem>>, vector<8x512xf32>,
    %c16_i32 = arith.constant 16 : i32
    %14 = tpu.dynamic_rotate %7 by %c16_i32 dim 1 : vector<8x512xf32>, i32 -> vector<8x512xf32>
    %15 = vector.extract_strided_slice %8 {offsets = [1, 0], sizes = [1, 512], strides = [1, 1]} : vector<9x512xf32> to vector<1x512xf32>
    %16 = vector.broadcast %15 : vector<1x512xf32> to vector<8x512xf32>
    %17 = arith.mulf %14, %16 : vector<8x512xf32>
    %c8 = arith.constant 8 : index
    %c0_10 = arith.constant 0 : index
    %18 = vector.load %arg8[%c8, %c0_10] : memref<72x512xf32, #tpu.memory_space<vmem>>, vector<8x512xf32>
    tpu.vector_store %arg8[%c8, %c0_10], %17 {strides = array<i32>} : memref<72x512xf32, #tpu.memory_space<vmem>>, vector<8x512xf32>,
    %c15_i32 = arith.constant 15 : i32
    %19 = tpu.dynamic_rotate %7 by %c15_i32 dim 1 : vector<8x512xf32>, i32 -> vector<8x512xf32>
    %20 = vector.extract_strided_slice %8 {offsets = [2, 0], sizes = [1, 512], strides = [1, 1]} : vector<9x512xf32> to vector<1x512xf32>
    %21 = vector.broadcast %20 : vector<1x512xf32> to vector<8x512xf32>
    %22 = arith.mulf %19, %21 : vector<8x512xf32>
    %c16 = arith.constant 16 : index
    %c0_11 = arith.constant 0 : index
    %23 = vector.load %arg8[%c16, %c0_11] : memref<72x512xf32, #tpu.memory_space<vmem>>, vector<8x512xf32>
    tpu.vector_store %arg8[%c16, %c0_11], %22 {strides = array<i32>} : memref<72x512xf32, #tpu.memory_space<vmem>>, vector<8x512xf32>,
    %c1_i32 = arith.constant 1 : i32
    %24 = tpu.dynamic_rotate %7 by %c1_i32 dim 1 : vector<8x512xf32>, i32 -> vector<8x512xf32>
    %25 = vector.extract_strided_slice %8 {offsets = [3, 0], sizes = [1, 512], strides = [1, 1]} : vector<9x512xf32> to vector<1x512xf32>
    %26 = vector.broadcast %25 : vector<1x512xf32> to vector<8x512xf32>
    %27 = arith.mulf %24, %26 : vector<8x512xf32>
    %c24 = arith.constant 24 : index
    %c0_12 = arith.constant 0 : index
    %28 = vector.load %arg8[%c24, %c0_12] : memref<72x512xf32, #tpu.memory_space<vmem>>, vector<8x512xf32>
    tpu.vector_store %arg8[%c24, %c0_12], %27 {strides = array<i32>} : memref<72x512xf32, #tpu.memory_space<vmem>>, vector<8x512xf32>,
    %c32 = arith.constant 32 : index
    %c0_13 = arith.constant 0 : index
    %29 = vector.load %arg8[%c32, %c0_13] : memref<72x512xf32, #tpu.memory_space<vmem>>, vector<8x512xf32>
    tpu.vector_store %arg8[%c32, %c0_13], %7 {strides = array<i32>} : memref<72x512xf32, #tpu.memory_space<vmem>>, vector<8x512xf32>,
    %c511_i32 = arith.constant 511 : i32
    %30 = tpu.dynamic_rotate %7 by %c511_i32 dim 1 : vector<8x512xf32>, i32 -> vector<8x512xf32>
    %31 = vector.extract_strided_slice %8 {offsets = [5, 0], sizes = [1, 512], strides = [1, 1]} : vector<9x512xf32> to vector<1x512xf32>
    %32 = vector.broadcast %31 : vector<1x512xf32> to vector<8x512xf32>
    %33 = arith.mulf %30, %32 : vector<8x512xf32>
    %c40 = arith.constant 40 : index
    %c0_14 = arith.constant 0 : index
    %34 = vector.load %arg8[%c40, %c0_14] : memref<72x512xf32, #tpu.memory_space<vmem>>, vector<8x512xf32>
    tpu.vector_store %arg8[%c40, %c0_14], %33 {strides = array<i32>} : memref<72x512xf32, #tpu.memory_space<vmem>>, vector<8x512xf32>,
    %c497_i32 = arith.constant 497 : i32
    %35 = tpu.dynamic_rotate %7 by %c497_i32 dim 1 : vector<8x512xf32>, i32 -> vector<8x512xf32>
    %36 = vector.extract_strided_slice %8 {offsets = [6, 0], sizes = [1, 512], strides = [1, 1]} : vector<9x512xf32> to vector<1x512xf32>
    %37 = vector.broadcast %36 : vector<1x512xf32> to vector<8x512xf32>
    %38 = arith.mulf %35, %37 : vector<8x512xf32>
    %c48 = arith.constant 48 : index
    %c0_15 = arith.constant 0 : index
    %39 = vector.load %arg8[%c48, %c0_15] : memref<72x512xf32, #tpu.memory_space<vmem>>, vector<8x512xf32>
    tpu.vector_store %arg8[%c48, %c0_15], %38 {strides = array<i32>} : memref<72x512xf32, #tpu.memory_space<vmem>>, vector<8x512xf32>,
    %c496_i32 = arith.constant 496 : i32
    %40 = tpu.dynamic_rotate %7 by %c496_i32 dim 1 : vector<8x512xf32>, i32 -> vector<8x512xf32>
    %41 = vector.extract_strided_slice %8 {offsets = [7, 0], sizes = [1, 512], strides = [1, 1]} : vector<9x512xf32> to vector<1x512xf32>
    %42 = vector.broadcast %41 : vector<1x512xf32> to vector<8x512xf32>
    %43 = arith.mulf %40, %42 : vector<8x512xf32>
    %c56 = arith.constant 56 : index
    %c0_16 = arith.constant 0 : index
    %44 = vector.load %arg8[%c56, %c0_16] : memref<72x512xf32, #tpu.memory_space<vmem>>, vector<8x512xf32>
    tpu.vector_store %arg8[%c56, %c0_16], %43 {strides = array<i32>} : memref<72x512xf32, #tpu.memory_space<vmem>>, vector<8x512xf32>,
    %c495_i32 = arith.constant 495 : i32
    %45 = tpu.dynamic_rotate %7 by %c495_i32 dim 1 : vector<8x512xf32>, i32 -> vector<8x512xf32>
    %46 = vector.extract_strided_slice %8 {offsets = [8, 0], sizes = [1, 512], strides = [1, 1]} : vector<9x512xf32> to vector<1x512xf32>
    %47 = vector.broadcast %46 : vector<1x512xf32> to vector<8x512xf32>
    %48 = arith.mulf %45, %47 : vector<8x512xf32>
    %c64 = arith.constant 64 : index
    %c0_17 = arith.constant 0 : index
    %49 = vector.load %arg8[%c64, %c0_17] : memref<72x512xf32, #tpu.memory_space<vmem>>, vector<8x512xf32>
    tpu.vector_store %arg8[%c64, %c0_17], %48 {strides = array<i32>} : memref<72x512xf32, #tpu.memory_space<vmem>>, vector<8x512xf32>,
    %c0_18 = arith.constant 0 : index
    %c0_19 = arith.constant 0 : index
    %50 = vector.load %arg5[%c0_18, %c0_19] : memref<24x72xf32, #tpu.memory_space<vmem>>, vector<24x72xf32>
    %c0_20 = arith.constant 0 : index
    %c0_21 = arith.constant 0 : index
    %51 = vector.load %arg8[%c0_20, %c0_21] : memref<72x512xf32, #tpu.memory_space<vmem>>, vector<72x512xf32>
    %cst_22 = arith.constant dense<0.000000e+00> : vector<24x512xf32>
    %52 = tpu.matmul %50, %51, %cst_22 {dimension_numbers = #tpu.dot_dimension_numbers<[1], [0], [0], [1], [0, 0, 1, 1], [], []>} : vector<24x72xf32>, vector<72x512xf32>, vector<24x512xf32> -> vector<24x512xf32>
    %c0_23 = arith.constant 0 : index
    %c0_24 = arith.constant 0 : index
    %53 = vector.load %arg6[%c0_23, %c0_24] : memref<24x1xf32, #tpu.memory_space<vmem>>, vector<24x1xf32>
    %54 = vector.broadcast %53 : vector<24x1xf32> to vector<24x512xf32>
    %55 = arith.addf %52, %54 : vector<24x512xf32>
    %cst_25 = arith.constant 0.000000e+00 : f32
    %56 = vector.broadcast %cst_25 : f32 to vector<24x512xf32>
    %57 = arith.maximumf %55, %56 : vector<24x512xf32>
    %c0_26 = arith.constant 0 : index
    %c0_27 = arith.constant 0 : index
    %58 = vector.load %arg7[%c0_26, %c0_27] : memref<24x512xf32, #tpu.memory_space<vmem>>, vector<24x512xf32>
    tpu.vector_store %arg7[%c0_26, %c0_27], %57 {strides = array<i32>} : memref<24x512xf32, #tpu.memory_space<vmem>>, vector<24x512xf32>,
    return
  }
  func.func @transform_0(%arg0: i32) -> (i32, i32) {
    %c0_i32 = arith.constant 0 : i32
    %c0_i32_0 = arith.constant 0 : i32
    %c0_i32_1 = arith.constant 0 : i32
    return %c0_i32, %c0_i32_0 : i32, i32
  }
  func.func @transform_1(%arg0: i32) -> (i32, i32) {
    %c0_i32 = arith.constant 0 : i32
    %c0_i32_0 = arith.constant 0 : i32
    %c0_i32_1 = arith.constant 0 : i32
    return %c0_i32, %c0_i32_0 : i32, i32
  }
  func.func @transform_2(%arg0: i32) -> (i32, i32) {
    %c0_i32 = arith.constant 0 : i32
    %c0_i32_0 = arith.constant 0 : i32
    %c0_i32_1 = arith.constant 0 : i32
    return %c0_i32, %c0_i32_0 : i32, i32
  }
  func.func @transform_3(%arg0: i32) -> (i32, i32) {
    %c0_i32 = arith.constant 0 : i32
    %c0_i32_0 = arith.constant 0 : i32
    %c0_i32_1 = arith.constant 0 : i32
    return %c0_i32, %c0_i32_0 : i32, i32
  }
  func.func @transform_4(%arg0: i32) -> (i32, i32) {
    %c0_i32 = arith.constant 0 : i32
    %c0_i32_0 = arith.constant 0 : i32
    %c0_i32_1 = arith.constant 0 : i32
    return %c0_i32, %c0_i32_0 : i32, i32
  }
  func.func @transform_5(%arg0: i32) -> (i32, i32) {
    %c0_i32 = arith.constant 0 : i32
    %c0_i32_0 = arith.constant 0 : i32
    %c0_i32_1 = arith.constant 0 : i32
    return %c0_i32, %c0_i32_0 : i32, i32
  }
  func.func @transform_6(%arg0: i32) -> (i32, i32) {
    %c0_i32 = arith.constant 0 : i32
    %c0_i32_0 = arith.constant 0 : i32
    %c0_i32_1 = arith.constant 0 : i32
    return %c0_i32, %c0_i32_0 : i32, i32
  }
}

</mosaic_0001>

<llo_original>
// kernel: tpu_custom_call.1
$region0: #{tpu_custom_call.1}
  #allocation0 [shape = 'u32[]', space=smem, size = 0x4, offset = 0x4, fixed_abs, tag = 'smem constant byte address 0x4 - core index']
  #allocation1 [shape = 'u32[72,128]{1,0:T(1,128)}', space=vmem, size = 0x9000, scoped, tag = 'internal scratch']
  #allocation2 [shape = 'f32[72,512]{1,0:T(8,128)}', space=vmem, size = 0x24000, scoped, tag = 'scratch operand']
  %s0 = inlined_call_operand.vmem [shape: f32[4,512], index: 0, kind: input, shape index: {}]
  %s1 = inlined_call_operand.vmem [shape: f32[8,4], index: 1, kind: input, shape index: {}]
  %s2 = inlined_call_operand.vmem [shape: f32[8,1], index: 2, kind: input, shape index: {}]
  %s3 = inlined_call_operand.hbm [shape: f32[9,512], index: 3, kind: input, shape index: {}]
  %s4 = inlined_call_operand.vmem [shape: f32[24,72], index: 4, kind: input, shape index: {}]
  %s5 = inlined_call_operand.vmem [shape: f32[24,1], index: 5, kind: input, shape index: {}]
  %s6 = inlined_call_operand.hbm [shape: f32[24,512], index: 6, kind: output, shape index: {}]
  %s7 = sld [smem:[#allocation0]]
  $region38: #{tpu_custom_call.1} parent=0
    _
  %s9 = ssub.s32 1, %s7
  %s10 = scalar_select 0, %s9, %s7
  $region1: #{tpu_custom_call.1} parent=0
    #allocation3 [shape = 'u8[32768]{0}', space=vmem, size = 0x8000, scoped, tag = 'input window, operand 3, single buffered']
    #allocation4 [shape = 's32[1]{0}', space=sflag, size = 0x4, scoped, tag = 'scoped memory for tpu_custom_call.1']
    #allocation5 [shape = 's32[1]{0}', space=sflag, size = 0x4, scoped, tag = 'scoped memory for tpu_custom_call.1']
    #allocation6 [shape = 'u8[49152]{0}', space=vmem, size = 0xc000, scoped, tag = 'output window, operand 0, single buffered']
    %11 = vsyncpa [#allocation4], 0
    %12 = vsyncpa [#allocation5], 0
    // Predicated region
    $region2: #{tpu_custom_call.1} parent=1 // pred_check
      _
    $region3: #{tpu_custom_call.1} parent=1 // pred_check_branch
      %14 = sbr.rel (0) target = $region5
    $region4: #{tpu_custom_call.1} parent=1 // pred_region
      _
    $region5: #{tpu_custom_call.1} parent=1 // pred_fallthru
      _
    // Predicated region
    $region6: #{tpu_custom_call.1} parent=1 // pred_check
      _
    $region7: #{tpu_custom_call.1} parent=1 // pred_check_branch
      %16 = sbr.rel (0) target = $region9
    $region8: #{tpu_custom_call.1} parent=1 // pred_region
      _
    $region9: #{tpu_custom_call.1} parent=1 // pred_fallthru
      _
    // Predicated region
    $region10: #{tpu_custom_call.1} parent=1 // pred_check
      _
    $region11: #{tpu_custom_call.1} parent=1 // pred_check_branch
      %18 = sbr.rel (0) target = $region13
    $region12: #{tpu_custom_call.1} parent=1 // pred_region
      _
    $region13: #{tpu_custom_call.1} parent=1 // pred_fallthru
      _
    // Predicated region
    $region14: #{tpu_custom_call.1} parent=1 // pred_check
      _
    $region15: #{tpu_custom_call.1} parent=1 // pred_check_branch
      %20 = sbr.rel (0) target = $region17
    $region16: #{tpu_custom_call.1} parent=1 // pred_region
      %22 = vsyncadd [#allocation4], 0
      %s23 = sshll.u32 %s3, 4
      %s24 = int_to_ptr.hbm [resolvable:$true] %s23
      %s25 = sshll.u32 [#allocation3], 4
      %s26 = int_to_ptr.vmem [resolvable:$true] %s25
      %31 = dma.hbm_to_vmem [thread:$0]  %s24, 1024, %s26, [#allocation4], 512, 512, 32
    $region17: #{tpu_custom_call.1} parent=1 // pred_fallthru
      _
    // Predicated region
    $region18: #{tpu_custom_call.1} parent=1 // pred_check
      _
    $region19: #{tpu_custom_call.1} parent=1 // pred_check_branch
      %33 = sbr.rel (0) target = $region21
    $region20: #{tpu_custom_call.1} parent=1 // pred_region
      _
    $region21: #{tpu_custom_call.1} parent=1 // pred_fallthru
      _
    // Predicated region
    $region22: #{tpu_custom_call.1} parent=1 // pred_check
      _
    $region23: #{tpu_custom_call.1} parent=1 // pred_check_branch
      %35 = sbr.rel (0) target = $region25
    $region24: #{tpu_custom_call.1} parent=1 // pred_region
      _
    $region25: #{tpu_custom_call.1} parent=1 // pred_fallthru
      _
    // Predicated region
    $region26: #{tpu_custom_call.1} parent=1 // pred_check
      _
    $region27: #{tpu_custom_call.1} parent=1 // pred_check_branch
      %37 = sbr.rel (0) target = $region29
    $region28: #{tpu_custom_call.1} parent=1 // pred_region
      %39 = dma.done [#allocation4], 1024
    $region29: #{tpu_custom_call.1} parent=1 // pred_fallthru
      _
    %v40 = vld [vmem:[%s1] sm:$0xff]
    %v41 = vld [vmem:[%s0] sm:$0xff]
    %v42 = vld [vmem:[%s0 + $0x8] sm:$0xff]
    %v43 = vld [vmem:[%s2] sm:$0xff]
    %45 = vset.pattern.permute.xlu0 0
    %46 = vperm.xlu0 %45, %v43
    %v47 = vpop.permute.xlu0 %46
    %51 = vst [vmem:[#allocation1] ss:$2 sm:$0xff] %v41
    %s52 = scalar_lea.vmem [#allocation1], 16
    %53 = vst [vmem:[%s52] ss:$2 sm:$0xff] %v42
    %v54 = vld.sshfl [vmem:[#allocation1] sm:$0xff pattern:$0x75316420]
    %v55 = vld.sshfl [vmem:[#allocation1 + $0x8] sm:$0xff pattern:$0x75316420]
    %v56 = vld.sshfl [vmem:[#allocation1 + $0x10] sm:$0xff pattern:$0x75316420]
    %v57 = vld.sshfl [vmem:[#allocation1 + $0x18] sm:$0xff pattern:$0x75316420]
    %vm58 = vcmask 31744
    %v60 = vsel %vm58, %v40, 0
    %vm62 = vcmask 1043456
    %v63 = vsel %vm62, %v54, 0
    %v65 = vsel %vm62, %v55, 0
    %v67 = vsel %vm62, %v56, 0
    %v69 = vsel %vm62, %v57, 0
    %71 = vmatpush.msra.mxu0 0.0
    %72 = vmatpush.msra.mxu0 0.0
    %73 = vmatpush.msra.mxu0 0.0
    %74 = vmatpush.msra.mxu0 0.0
    %75 = vmatpush.msra.mxu0 0.0
    %76 = vmatpush.msra.mxu0 0.0
    %77 = vmatpush.msra.mxu0 0.0
    %78 = vmatpush.msra.mxu0 0.0
    %79 = vmatpush.msra.mxu0 0.0
    %80 = vmatpush.msra.mxu0 0.0
    %81 = vmatpush.msra.mxu0 0.0
    %82 = vmatpush.msra.mxu0 0.0
    %83 = vmatpush.msra.mxu0 0.0
    %84 = vmatpush.msra.mxu0 0.0
    %85 = vmatpush.msra.mxu0 0.0
    %86 = vmatpush.msra.mxu0 %v63
    %87 = vmatmul.f32.gmra.mxu0 %v60
    %v88 = vpop.f32.mrf.mxu0
    %v89 = vadd.f32 %v47, %v88
    %90 = vdwg.mxu0
    %91 = vmatpush.msra.mxu0 0.0
    %92 = vmatpush.msra.mxu0 0.0
    %93 = vmatpush.msra.mxu0 0.0
    %94 = vmatpush.msra.mxu0 0.0
    %95 = vmatpush.msra.mxu0 0.0
    %96 = vmatpush.msra.mxu0 0.0
    %97 = vmatpush.msra.mxu0 0.0
    %98 = vmatpush.msra.mxu0 0.0
    %99 = vmatpush.msra.mxu0 0.0
    %100 = vmatpush.msra.mxu0 0.0
    %101 = vmatpush.msra.mxu0 0.0
    %102 = vmatpush.msra.mxu0 0.0
    %103 = vmatpush.msra.mxu0 0.0
    %104 = vmatpush.msra.mxu0 0.0
    %105 = vmatpush.msra.mxu0 0.0
    %106 = vmatpush.msra.mxu0 %v65
    %107 = vmatmul.f32.gmra.mxu0 %v60
    %v108 = vpop.f32.mrf.mxu0
    %v109 = vadd.f32 %v47, %v108
    %110 = vdwg.mxu0
    %111 = vmatpush.msra.mxu0 0.0
    %112 = vmatpush.msra.mxu0 0.0
    %113 = vmatpush.msra.mxu0 0.0
    %114 = vmatpush.msra.mxu0 0.0
    %115 = vmatpush.msra.mxu0 0.0
    %116 = vmatpush.msra.mxu0 0.0
    %117 = vmatpush.msra.mxu0 0.0
    %118 = vmatpush.msra.mxu0 0.0
    %119 = vmatpush.msra.mxu0 0.0
    %120 = vmatpush.msra.mxu0 0.0
    %121 = vmatpush.msra.mxu0 0.0
    %122 = vmatpush.msra.mxu0 0.0
    %123 = vmatpush.msra.mxu0 0.0
    %124 = vmatpush.msra.mxu0 0.0
    %125 = vmatpush.msra.mxu0 0.0
    %126 = vmatpush.msra.mxu0 %v67
    %127 = vmatmul.f32.gmra.mxu0 %v60
    %v128 = vpop.f32.mrf.mxu0
    %v129 = vadd.f32 %v47, %v128
    %130 = vdwg.mxu0
    %131 = vmatpush.msra.mxu0 0.0
    %132 = vmatpush.msra.mxu0 0.0
    %133 = vmatpush.msra.mxu0 0.0
    %134 = vmatpush.msra.mxu0 0.0
    %135 = vmatpush.msra.mxu0 0.0
    %136 = vmatpush.msra.mxu0 0.0
    %137 = vmatpush.msra.mxu0 0.0
    %138 = vmatpush.msra.mxu0 0.0
    %139 = vmatpush.msra.mxu0 0.0
    %140 = vmatpush.msra.mxu0 0.0
    %141 = vmatpush.msra.mxu0 0.0
    %142 = vmatpush.msra.mxu0 0.0
    %143 = vmatpush.msra.mxu0 0.0
    %144 = vmatpush.msra.mxu0 0.0
    %145 = vmatpush.msra.mxu0 0.0
    %146 = vmatpush.msra.mxu0 %v69
    %147 = vmatmul.f32.gmra.mxu0 %v60
    %v148 = vpop.f32.mrf.mxu0
    %v149 = vadd.f32 %v47, %v148
    %150 = vdwg.mxu0
    %v151 = vmax.f32 %v89, 0.0
    %v152 = vmax.f32 %v109, 0.0
    %v153 = vmax.f32 %v129, 0.0
    %v154 = vmax.f32 %v149, 0.0
    %v155 = vld [vmem:[#allocation3] sm:$0xff]
    %v156 = vld [vmem:[#allocation3 + $0x8] sm:$0xff]
    %v157 = vld [vmem:[#allocation3 + $0x10] sm:$0xff]
    %v158 = vld [vmem:[#allocation3 + $0x18] sm:$0xff]
    %v159 = vld [vmem:[#allocation3 + $0x20] sm:$0x1]
    %v160 = vld [vmem:[#allocation3 + $0x28] sm:$0x1]
    %v161 = vld [vmem:[#allocation3 + $0x30] sm:$0x1]
    %v162 = vld [vmem:[#allocation3 + $0x38] sm:$0x1]
    %163 = vrot.lane.b32.xlu0 %v151, 17
    %v164 = vpop.permute.xlu0 %163
    %165 = vrot.lane.b32.xlu0 %v152, 17
    %v166 = vpop.permute.xlu0 %165
    %167 = vrot.lane.b32.xlu0 %v153, 17
    %v168 = vpop.permute.xlu0 %167
    %169 = vrot.lane.b32.xlu0 %v154, 17
    %v170 = vpop.permute.xlu0 %169
    %v171 = vlaneseq
    %v172 = vand.u32 %v171, 127
    %vm173 = vcmp.lt.s32.totalorder %v172, 17
    %v174 = vsel %vm173, %v168, %v170
    %v175 = vsel %vm173, %v166, %v168
    %v176 = vsel %vm173, %v164, %v166
    %v177 = vsel %vm173, %v170, %v164
    %v178 = vperm.slane %v155, 0
    %v179 = vperm.slane %v156, 0
    %v180 = vperm.slane %v157, 0
    %v181 = vperm.slane %v158, 0
    %v182 = vmul.f32 %v177, %v178
    %v183 = vmul.f32 %v176, %v179
    %v184 = vmul.f32 %v175, %v180
    %v185 = vmul.f32 %v174, %v181
    %186 = vst [vmem:[#allocation2] sm:$0xff] %v182
    %187 = vst [vmem:[#allocation2 + $0x8] sm:$0xff] %v183
    %188 = vst [vmem:[#allocation2 + $0x10] sm:$0xff] %v184
    %189 = vst [vmem:[#allocation2 + $0x18] sm:$0xff] %v185
    %190 = vrot.lane.b32.xlu0 %v151, 16
    %v191 = vpop.permute.xlu0 %190
    %192 = vrot.lane.b32.xlu0 %v152, 16
    %v193 = vpop.permute.xlu0 %192
    %194 = vrot.lane.b32.xlu0 %v153, 16
    %v195 = vpop.permute.xlu0 %194
    %196 = vrot.lane.b32.xlu0 %v154, 16
    %v197 = vpop.permute.xlu0 %196
    %vm198 = vcmp.lt.s32.totalorder %v172, 16
    %v199 = vsel %vm198, %v195, %v197
    %v200 = vsel %vm198, %v193, %v195
    %v201 = vsel %vm198, %v191, %v193
    %v202 = vsel %vm198, %v197, %v191
    %v203 = vperm.slane %v155, 1
    %v204 = vperm.slane %v156, 1
    %v205 = vperm.slane %v157, 1
    %v206 = vperm.slane %v158, 1
    %v207 = vmul.f32 %v202, %v203
    %v208 = vmul.f32 %v201, %v204
    %v209 = vmul.f32 %v200, %v205
    %v210 = vmul.f32 %v199, %v206
    %211 = vst [vmem:[#allocation2 + $0x20] sm:$0xff] %v207
    %212 = vst [vmem:[#allocation2 + $0x28] sm:$0xff] %v208
    %213 = vst [vmem:[#allocation2 + $0x30] sm:$0xff] %v209
    %214 = vst [vmem:[#allocation2 + $0x38] sm:$0xff] %v210
    %215 = vrot.lane.b32.xlu0 %v151, 15
    %v216 = vpop.permute.xlu0 %215
    %217 = vrot.lane.b32.xlu0 %v152, 15
    %v218 = vpop.permute.xlu0 %217
    %219 = vrot.lane.b32.xlu0 %v153, 15
    %v220 = vpop.permute.xlu0 %219
    %221 = vrot.lane.b32.xlu0 %v154, 15
    %v222 = vpop.permute.xlu0 %221
    %vm223 = vcmp.lt.s32.totalorder %v172, 15
    %v224 = vsel %vm223, %v220, %v222
    %v225 = vsel %vm223, %v218, %v220
    %v226 = vsel %vm223, %v216, %v218
    %v227 = vsel %vm223, %v222, %v216
    %v228 = vperm.slane %v155, 2
    %v229 = vperm.slane %v156, 2
    %v230 = vperm.slane %v157, 2
    %v231 = vperm.slane %v158, 2
    %v232 = vmul.f32 %v227, %v228
    %v233 = vmul.f32 %v226, %v229
    %v234 = vmul.f32 %v225, %v230
    %v235 = vmul.f32 %v224, %v231
    %236 = vst [vmem:[#allocation2 + $0x40] sm:$0xff] %v232
    %237 = vst [vmem:[#allocation2 + $0x48] sm:$0xff] %v233
    %238 = vst [vmem:[#allocation2 + $0x50] sm:$0xff] %v234
    %239 = vst [vmem:[#allocation2 + $0x58] sm:$0xff] %v235
    %240 = vrot.lane.b32.xlu0 %v151, 1
    %v241 = vpop.permute.xlu0 %240
    %242 = vrot.lane.b32.xlu0 %v152, 1
    %v243 = vpop.permute.xlu0 %242
    %244 = vrot.lane.b32.xlu0 %v153, 1
    %v245 = vpop.permute.xlu0 %244
    %246 = vrot.lane.b32.xlu0 %v154, 1
    %v247 = vpop.permute.xlu0 %246
    %vm248 = vcmp.lt.s32.totalorder %v172, 1
    %v249 = vsel %vm248, %v245, %v247
    %v250 = vsel %vm248, %v243, %v245
    %v251 = vsel %vm248, %v241, %v243
    %v252 = vsel %vm248, %v247, %v241
    %v253 = vperm.slane %v155, 3
    %v254 = vperm.slane %v156, 3
    %v255 = vperm.slane %v157, 3
    %v256 = vperm.slane %v158, 3
    %v257 = vmul.f32 %v252, %v253
    %v258 = vmul.f32 %v251, %v254
    %v259 = vmul.f32 %v250, %v255
    %v260 = vmul.f32 %v249, %v256
    %261 = vst [vmem:[#allocation2 + $0x60] sm:$0xff] %v257
    %262 = vst [vmem:[#allocation2 + $0x68] sm:$0xff] %v258
    %263 = vst [vmem:[#allocation2 + $0x70] sm:$0xff] %v259
    %264 = vst [vmem:[#allocation2 + $0x78] sm:$0xff] %v260
    %265 = vst [vmem:[#allocation2 + $0x80] sm:$0xff] %v151
    %266 = vst [vmem:[#allocation2 + $0x88] sm:$0xff] %v152
    %267 = vst [vmem:[#allocation2 + $0x90] sm:$0xff] %v153
    %268 = vst [vmem:[#allocation2 + $0x98] sm:$0xff] %v154
    %269 = vrot.lane.b32.xlu0 %v151, 127
    %v270 = vpop.permute.xlu0 %269
    %271 = vrot.lane.b32.xlu0 %v152, 127
    %v272 = vpop.permute.xlu0 %271
    %273 = vrot.lane.b32.xlu0 %v153, 127
    %v274 = vpop.permute.xlu0 %273
    %275 = vrot.lane.b32.xlu0 %v154, 127
    %v276 = vpop.permute.xlu0 %275
    %vm277 = vcmp.lt.s32.totalorder %v172, 127
    %v278 = vsel %vm277, %v274, %v276
    %v279 = vsel %vm277, %v272, %v274
    %v280 = vsel %vm277, %v270, %v272
    %v281 = vsel %vm277, %v276, %v270
    %v282 = vperm.slane %v155, 5
    %v283 = vperm.slane %v156, 5
    %v284 = vperm.slane %v157, 5
    %v285 = vperm.slane %v158, 5
    %v286 = vmul.f32 %v280, %v282
    %v287 = vmul.f32 %v279, %v283
    %v288 = vmul.f32 %v278, %v284
    %v289 = vmul.f32 %v281, %v285
    %290 = vst [vmem:[#allocation2 + $0xa0] sm:$0xff] %v286
    %291 = vst [vmem:[#allocation2 + $0xa8] sm:$0xff] %v287
    %292 = vst [vmem:[#allocation2 + $0xb0] sm:$0xff] %v288
    %293 = vst [vmem:[#allocation2 + $0xb8] sm:$0xff] %v289
    %294 = vrot.lane.b32.xlu0 %v151, 113
    %v295 = vpop.permute.xlu0 %294
    %296 = vrot.lane.b32.xlu0 %v152, 113
    %v297 = vpop.permute.xlu0 %296
    %298 = vrot.lane.b32.xlu0 %v153, 113
    %v299 = vpop.permute.xlu0 %298
    %300 = vrot.lane.b32.xlu0 %v154, 113
    %v301 = vpop.permute.xlu0 %300
    %vm302 = vcmp.lt.s32.totalorder %v172, 113
    %v303 = vsel %vm302, %v299, %v301
    %v304 = vsel %vm302, %v297, %v299
    %v305 = vsel %vm302, %v295, %v297
    %v306 = vsel %vm302, %v301, %v295
    %v307 = vperm.slane %v155, 6
    %v308 = vperm.slane %v156, 6
    %v309 = vperm.slane %v157, 6
    %v310 = vperm.slane %v158, 6
    %v311 = vmul.f32 %v305, %v307
    %v312 = vmul.f32 %v304, %v308
    %v313 = vmul.f32 %v303, %v309
    %v314 = vmul.f32 %v306, %v310
    %315 = vst [vmem:[#allocation2 + $0xc0] sm:$0xff] %v311
    %316 = vst [vmem:[#allocation2 + $0xc8] sm:$0xff] %v312
    %317 = vst [vmem:[#allocation2 + $0xd0] sm:$0xff] %v313
    %318 = vst [vmem:[#allocation2 + $0xd8] sm:$0xff] %v314
    %319 = vrot.lane.b32.xlu0 %v151, 112
    %v320 = vpop.permute.xlu0 %319
    %321 = vrot.lane.b32.xlu0 %v152, 112
    %v322 = vpop.permute.xlu0 %321
    %323 = vrot.lane.b32.xlu0 %v153, 112
    %v324 = vpop.permute.xlu0 %323
    %325 = vrot.lane.b32.xlu0 %v154, 112
    %v326 = vpop.permute.xlu0 %325
    %vm327 = vcmp.lt.s32.totalorder %v172, 112
    %v328 = vsel %vm327, %v324, %v326
    %v329 = vsel %vm327, %v322, %v324
    %v330 = vsel %vm327, %v320, %v322
    %v331 = vsel %vm327, %v326, %v320
    %v332 = vperm.slane %v155, 7
    %v333 = vperm.slane %v156, 7
    %v334 = vperm.slane %v157, 7
    %v335 = vperm.slane %v158, 7
    %v336 = vmul.f32 %v330, %v332
    %v337 = vmul.f32 %v329, %v333
    %v338 = vmul.f32 %v328, %v334
    %v339 = vmul.f32 %v331, %v335
    %340 = vst [vmem:[#allocation2 + $0xe0] sm:$0xff] %v336
    %341 = vst [vmem:[#allocation2 + $0xe8] sm:$0xff] %v337
    %342 = vst [vmem:[#allocation2 + $0xf0] sm:$0xff] %v338
    %343 = vst [vmem:[#allocation2 + $0xf8] sm:$0xff] %v339
    %344 = vrot.lane.b32.xlu0 %v151, 111
    %v345 = vpop.permute.xlu0 %344
    %346 = vrot.lane.b32.xlu0 %v152, 111
    %v347 = vpop.permute.xlu0 %346
    %348 = vrot.lane.b32.xlu0 %v153, 111
    %v349 = vpop.permute.xlu0 %348
    %350 = vrot.lane.b32.xlu0 %v154, 111
    %v351 = vpop.permute.xlu0 %350
    %vm352 = vcmp.lt.s32.totalorder %v172, 111
    %v353 = vsel %vm352, %v349, %v351
    %v354 = vsel %vm352, %v347, %v349
    %v355 = vsel %vm352, %v345, %v347
    %v356 = vsel %vm352, %v351, %v345
    %v357 = vperm.slane %v159, 0
    %v358 = vperm.slane %v160, 0
    %v359 = vperm.slane %v161, 0
    %v360 = vperm.slane %v162, 0
    %v361 = vmul.f32 %v355, %v357
    %v362 = vmul.f32 %v354, %v358
    %v363 = vmul.f32 %v353, %v359
    %v364 = vmul.f32 %v356, %v360
    %365 = vst [vmem:[#allocation2 + $0x100] sm:$0xff] %v361
    %366 = vst [vmem:[#allocation2 + $0x108] sm:$0xff] %v362
    %367 = vst [vmem:[#allocation2 + $0x110] sm:$0xff] %v363
    %368 = vst [vmem:[#allocation2 + $0x118] sm:$0xff] %v364
    %v369 = vld [vmem:[%s4] sm:$0xff]
    %v370 = vld [vmem:[%s4 + $0x8] sm:$0xff]
    %v371 = vld [vmem:[%s4 + $0x10] sm:$0xff]
    %v372 = vld [vmem:[#allocation2] sm:$0xff]
    %v373 = vld [vmem:[#allocation2 + $0x8] sm:$0xff]
    %v374 = vld [vmem:[#allocation2 + $0x10] sm:$0xff]
    %v375 = vld [vmem:[#allocation2 + $0x18] sm:$0xff]
    %v376 = vld [vmem:[#allocation2 + $0x20] sm:$0xff]
    %v377 = vld [vmem:[#allocation2 + $0x28] sm:$0xff]
    %v378 = vld [vmem:[#allocation2 + $0x30] sm:$0xff]
    %v379 = vld [vmem:[#allocation2 + $0x38] sm:$0xff]
    %v380 = vld [vmem:[#allocation2 + $0x40] sm:$0xff]
    %v381 = vld [vmem:[#allocation2 + $0x48] sm:$0xff]
    %v382 = vld [vmem:[#allocation2 + $0x50] sm:$0xff]
    %v383 = vld [vmem:[#allocation2 + $0x58] sm:$0xff]
    %v384 = vld [vmem:[#allocation2 + $0x60] sm:$0xff]
    %v385 = vld [vmem:[#allocation2 + $0x68] sm:$0xff]
    %v386 = vld [vmem:[#allocation2 + $0x70] sm:$0xff]
    %v387 = vld [vmem:[#allocation2 + $0x78] sm:$0xff]
    %v388 = vld [vmem:[#allocation2 + $0x80] sm:$0xff]
    %v389 = vld [vmem:[#allocation2 + $0x88] sm:$0xff]
    %v390 = vld [vmem:[#allocation2 + $0x90] sm:$0xff]
    %v391 = vld [vmem:[#allocation2 + $0x98] sm:$0xff]
    %v392 = vld [vmem:[#allocation2 + $0xa0] sm:$0xff]
    %v393 = vld [vmem:[#allocation2 + $0xa8] sm:$0xff]
    %v394 = vld [vmem:[#allocation2 + $0xb0] sm:$0xff]
    %v395 = vld [vmem:[#allocation2 + $0xb8] sm:$0xff]
    %v396 = vld [vmem:[#allocation2 + $0xc0] sm:$0xff]
    %v397 = vld [vmem:[#allocation2 + $0xc8] sm:$0xff]
    %v398 = vld [vmem:[#allocation2 + $0xd0] sm:$0xff]
    %v399 = vld [vmem:[#allocation2 + $0xd8] sm:$0xff]
    %v400 = vld [vmem:[#allocation2 + $0xe0] sm:$0xff]
    %v401 = vld [vmem:[#allocation2 + $0xe8] sm:$0xff]
    %v402 = vld [vmem:[#allocation2 + $0xf0] sm:$0xff]
    %v403 = vld [vmem:[#allocation2 + $0xf8] sm:$0xff]
    %v404 = vld [vmem:[#allocation2 + $0x100] sm:$0xff]
    %v405 = vld [vmem:[#allocation2 + $0x108] sm:$0xff]
    %v406 = vld [vmem:[#allocation2 + $0x110] sm:$0xff]
    %v407 = vld [vmem:[#allocation2 + $0x118] sm:$0xff]
    %v408 = vld [vmem:[%s5] sm:$0xff]
    %v409 = vld [vmem:[%s5 + $0x8] sm:$0xff]
    %v410 = vld [vmem:[%s5 + $0x10] sm:$0xff]
    %412 = vset.pattern.permute.xlu0 0
    %413 = vperm.xlu0 %412, %v408
    %v414 = vpop.permute.xlu0 %413
    %417 = vset.pattern.permute.xlu0 0
    %418 = vperm.xlu0 %417, %v409
    %v419 = vpop.permute.xlu0 %418
    %422 = vset.pattern.permute.xlu0 0
    %423 = vperm.xlu0 %422, %v410
    %v424 = vpop.permute.xlu0 %423
    %vm426 = vcmask 588800
    %v428 = vsel %vm426, %v369, 0
    %v431 = vsel %vm426, %v370, 0
    %v434 = vsel %vm426, %v371, 0
    %436 = vmatpush.msra.mxu0 0.0
    %437 = vmatpush.msra.mxu0 0.0
    %438 = vmatpush.msra.mxu0 0.0
    %439 = vmatpush.msra.mxu0 0.0
    %440 = vmatpush.msra.mxu0 0.0
    %441 = vmatpush.msra.mxu0 0.0
    %442 = vmatpush.msra.mxu0 0.0
    %443 = vmatpush.msra.mxu0 %v404
    %444 = vmatpush.msra.mxu0 %v400
    %445 = vmatpush.msra.mxu0 %v396
    %446 = vmatpush.msra.mxu0 %v392
    %447 = vmatpush.msra.mxu0 %v388
    %448 = vmatpush.msra.mxu0 %v384
    %449 = vmatpush.msra.mxu0 %v380
    %450 = vmatpush.msra.mxu0 %v376
    %451 = vmatpush.msra.mxu0 %v372
    %452 = vmatmul.f32.gmra.mxu0 %v428
    %v453 = vpop.f32.mrf.mxu0
    %v454 = vadd.f32 %v414, %v453
    %455 = vmatmul.f32.gmra.mxu0 %v431
    %v456 = vpop.f32.mrf.mxu0
    %v457 = vadd.f32 %v419, %v456
    %458 = vmatmul.f32.gmra.mxu0 %v434
    %v459 = vpop.f32.mrf.mxu0
    %v460 = vadd.f32 %v424, %v459
    %461 = vdwg.mxu0
    %462 = vmatpush.msra.mxu0 0.0
    %463 = vmatpush.msra.mxu0 0.0
    %464 = vmatpush.msra.mxu0 0.0
    %465 = vmatpush.msra.mxu0 0.0
    %466 = vmatpush.msra.mxu0 0.0
    %467 = vmatpush.msra.mxu0 0.0
    %468 = vmatpush.msra.mxu0 0.0
    %469 = vmatpush.msra.mxu0 %v405
    %470 = vmatpush.msra.mxu0 %v401
    %471 = vmatpush.msra.mxu0 %v397
    %472 = vmatpush.msra.mxu0 %v393
    %473 = vmatpush.msra.mxu0 %v389
    %474 = vmatpush.msra.mxu0 %v385
    %475 = vmatpush.msra.mxu0 %v381
    %476 = vmatpush.msra.mxu0 %v377
    %477 = vmatpush.msra.mxu0 %v373
    %478 = vmatmul.f32.gmra.mxu0 %v428
    %v479 = vpop.f32.mrf.mxu0
    %v480 = vadd.f32 %v414, %v479
    %481 = vmatmul.f32.gmra.mxu0 %v431
    %v482 = vpop.f32.mrf.mxu0
    %v483 = vadd.f32 %v419, %v482
    %484 = vmatmul.f32.gmra.mxu0 %v434
    %v485 = vpop.f32.mrf.mxu0
    %v486 = vadd.f32 %v424, %v485
    %487 = vdwg.mxu0
    %488 = vmatpush.msra.mxu0 0.0
    %489 = vmatpush.msra.mxu0 0.0
    %490 = vmatpush.msra.mxu0 0.0
    %491 = vmatpush.msra.mxu0 0.0
    %492 = vmatpush.msra.mxu0 0.0
    %493 = vmatpush.msra.mxu0 0.0
    %494 = vmatpush.msra.mxu0 0.0
    %495 = vmatpush.msra.mxu0 %v406
    %496 = vmatpush.msra.mxu0 %v402
    %497 = vmatpush.msra.mxu0 %v398
    %498 = vmatpush.msra.mxu0 %v394
    %499 = vmatpush.msra.mxu0 %v390
    %500 = vmatpush.msra.mxu0 %v386
    %501 = vmatpush.msra.mxu0 %v382
    %502 = vmatpush.msra.mxu0 %v378
    %503 = vmatpush.msra.mxu0 %v374
    %504 = vmatmul.f32.gmra.mxu0 %v428
    %v505 = vpop.f32.mrf.mxu0
    %v506 = vadd.f32 %v414, %v505
    %507 = vmatmul.f32.gmra.mxu0 %v431
    %v508 = vpop.f32.mrf.mxu0
    %v509 = vadd.f32 %v419, %v508
    %510 = vmatmul.f32.gmra.mxu0 %v434
    %v511 = vpop.f32.mrf.mxu0
    %v512 = vadd.f32 %v424, %v511
    %513 = vdwg.mxu0
    %514 = vmatpush.msra.mxu0 0.0
    %515 = vmatpush.msra.mxu0 0.0
    %516 = vmatpush.msra.mxu0 0.0
    %517 = vmatpush.msra.mxu0 0.0
    %518 = vmatpush.msra.mxu0 0.0
    %519 = vmatpush.msra.mxu0 0.0
    %520 = vmatpush.msra.mxu0 0.0
    %521 = vmatpush.msra.mxu0 %v407
    %522 = vmatpush.msra.mxu0 %v403
    %523 = vmatpush.msra.mxu0 %v399
    %524 = vmatpush.msra.mxu0 %v395
    %525 = vmatpush.msra.mxu0 %v391
    %526 = vmatpush.msra.mxu0 %v387
    %527 = vmatpush.msra.mxu0 %v383
    %528 = vmatpush.msra.mxu0 %v379
    %529 = vmatpush.msra.mxu0 %v375
    %530 = vmatmul.f32.gmra.mxu0 %v428
    %v531 = vpop.f32.mrf.mxu0
    %v532 = vadd.f32 %v414, %v531
    %533 = vmatmul.f32.gmra.mxu0 %v431
    %v534 = vpop.f32.mrf.mxu0
    %v535 = vadd.f32 %v419, %v534
    %536 = vmatmul.f32.gmra.mxu0 %v434
    %v537 = vpop.f32.mrf.mxu0
    %v538 = vadd.f32 %v424, %v537
    %539 = vdwg.mxu0
    %v540 = vmax.f32 %v454, 0.0
    %v541 = vmax.f32 %v480, 0.0
    %v542 = vmax.f32 %v506, 0.0
    %v543 = vmax.f32 %v532, 0.0
    %v544 = vmax.f32 %v457, 0.0
    %v545 = vmax.f32 %v483, 0.0
    %v546 = vmax.f32 %v509, 0.0
    %v547 = vmax.f32 %v535, 0.0
    %v548 = vmax.f32 %v460, 0.0
    %v549 = vmax.f32 %v486, 0.0
    %v550 = vmax.f32 %v512, 0.0
    %v551 = vmax.f32 %v538, 0.0
    %552 = vst [vmem:[#allocation6] sm:$0xff] %v540
    %553 = vst [vmem:[#allocation6 + $0x8] sm:$0xff] %v541
    %554 = vst [vmem:[#allocation6 + $0x10] sm:$0xff] %v542
    %555 = vst [vmem:[#allocation6 + $0x18] sm:$0xff] %v543
    %556 = vst [vmem:[#allocation6 + $0x20] sm:$0xff] %v544
    %557 = vst [vmem:[#allocation6 + $0x28] sm:$0xff] %v545
    %558 = vst [vmem:[#allocation6 + $0x30] sm:$0xff] %v546
    %559 = vst [vmem:[#allocation6 + $0x38] sm:$0xff] %v547
    %560 = vst [vmem:[#allocation6 + $0x40] sm:$0xff] %v548
    %561 = vst [vmem:[#allocation6 + $0x48] sm:$0xff] %v549
    %562 = vst [vmem:[#allocation6 + $0x50] sm:$0xff] %v550
    %563 = vst [vmem:[#allocation6 + $0x58] sm:$0xff] %v551
    // Predicated region
    $region30: #{tpu_custom_call.1} parent=1 // pred_check
      _
    $region31: #{tpu_custom_call.1} parent=1 // pred_check_branch
      %565 = sbr.rel (0) target = $region33
    $region32: #{tpu_custom_call.1} parent=1 // pred_region
      %567 = vsyncadd [#allocation5], 0
      %s568 = sshll.u32 [#allocation6], 4
      %s569 = int_to_ptr.vmem [resolvable:$true] %s568
      %s570 = sshll.u32 %s6, 4
      %s571 = int_to_ptr.hbm [resolvable:$true] %s570
      %576 = dma.vmem_to_hbm [thread:$0]  %s569, 1536, %s571, [#allocation5], 512, 512, 32
    $region33: #{tpu_custom_call.1} parent=1 // pred_fallthru
      _
    // Predicated region
    $region34: #{tpu_custom_call.1} parent=1 // pred_check
      _
    $region35: #{tpu_custom_call.1} parent=1 // pred_check_branch
      %578 = sbr.rel (0) target = $region37
    $region36: #{tpu_custom_call.1} parent=1 // pred_region
      %580 = dma.done [#allocation5], 1536
    $region37: #{tpu_custom_call.1} parent=1 // pred_fallthru
      _
    %581 = vsyncpa [#allocation4], 1
    %582 = vsyncpa [#allocation5], 1

</llo_original>
